<compile_context>
chip_gen: v6e
topology: v6e:2x2x1
jax: 0.10.0
libtpu: 0.0.40
codegen_flags: <defaults>
</compile_context>

<pallas_src>
import functools
import math

import jax
import jax.numpy as jnp
from jax import lax
from jax.experimental import pallas as pl
from jax.experimental.pallas import tpu as pltpu


def _round_up(x: int, m: int) -> int:
    return ((x + m - 1) // m) * m


def _mdn_fused_kernel(x_ref, w_ref, b_ref, out_ref, *, G, GO):
    """One fused matmul + per-section activation, lane-dense output.

    Column layout of the fused output axis:
      [0, G)            : pi logits   -> softmax over these lanes only
      [G, G+GO)         : sigma       -> exp
      [G+GO, G+2*GO)    : mu          -> identity
      [G+2*GO, N_pad)   : zero padding (discarded by the wrapper)
    """
    x = x_ref[...]                                             # (BM, D)
    y = jnp.dot(x, w_ref[...], preferred_element_type=jnp.float32)
    y = y + b_ref[...]                                         # (BM, N_pad)

    n_pad = y.shape[1]
    lane = lax.broadcasted_iota(jnp.int32, (1, n_pad), 1)      # (1, N_pad)
    pi_mask = lane < G                                         # broadcasts over rows
    sig_mask = jnp.logical_and(lane >= G, lane < G + GO)
    mu_mask = jnp.logical_and(lane >= G + GO, lane < G + 2 * GO)

    # Row-wise max restricted to the pi lanes.
    m = jnp.max(jnp.where(pi_mask, y, -jnp.inf), axis=-1, keepdims=True)
    # Single full-tile exp: pi lanes shifted by the row max (softmax numerator),
    # all other lanes unshifted so the same pass yields exp(sigma logits).
    e = jnp.exp(y - jnp.where(pi_mask, m, 0.0))                # (BM, N_pad)
    s = jnp.sum(jnp.where(pi_mask, e, 0.0), axis=-1, keepdims=True)
    pi_vals = e * pl.reciprocal(s)                             # exact; (BM,1) column

    out = jnp.where(pi_mask, pi_vals,
                    jnp.where(sig_mask, e,
                              jnp.where(mu_mask, y, 0.0)))
    out_ref[...] = out


def fuse_mdn_params(params):
    """Fuse the three heads along the output axis and pad to 128 lanes.
    Call ONCE (at init / outside the training step); the forward takes the
    fused tensors directly so no per-call weight concat/pad is paid."""
    pi_w, pi_b, sig_w, sig_b, mu_w, mu_b = params
    w = jnp.concatenate([pi_w, sig_w, mu_w], axis=1)           # (D, N)
    b = jnp.concatenate([pi_b, sig_b, mu_b], axis=1)           # (1, N)
    n = w.shape[1]
    n_pad = _round_up(n, 128)
    w = jnp.pad(w, ((0, 0), (0, n_pad - n)))
    b = jnp.pad(b, ((0, 0), (0, n_pad - n)))
    return w, b


def mixture_density_mlp(x, fused_w, fused_b, num_gaussians, output_dim,
                        *, block_batch=1024):
    """Forward pass. x: (B, input_dim) float32. Returns (pi, mu, sigma)."""
    B, D = x.shape
    G = num_gaussians
    GO = num_gaussians * output_dim
    N_pad = fused_w.shape[1]
    assert N_pad % 128 == 0 and N_pad >= G + 2 * GO

    # ---- batch tiling -------------------------------------------------------
    block_batch = _round_up(max(block_batch, 8), 8)
    BM = min(block_batch, _round_up(B, 8))
    # v7x megacore: once the batch is worth splitting, guarantee >= 2 balanced
    # grid steps so both TensorCores get work (no-op for very large B, where
    # the grid already has many steps).
    if B >= 256:
        BM = min(BM, _round_up(pl.cdiv(B, 2), 8))
    BM = max(BM, 8)

    # Tiny-batch case only: make the single block well-formed with a <8-row pad.
    x_in = x
    B_arr = B
    if B < BM:
        x_in = jnp.pad(x, ((0, BM - B), (0, 0)))
        B_arr = BM
    grid = (pl.cdiv(B_arr, BM),)   # ragged last block handled by Pallas (masked)

    # ---- VMEM budget (double-buffered x/out tiles + resident fused params) ---
    vmem_needed = (2 * BM * D * 4) + (2 * BM * N_pad * 4) \
        + 2 * (D * N_pad * 4) + 2 * (N_pad * 4)
    vmem_limit = int(min(64 * 1024 * 1024, max(2 * vmem_needed, 16 * 1024 * 1024)))

    out_full = pl.pallas_call(
        functools.partial(_mdn_fused_kernel, G=G, GO=GO),
        out_shape=jax.ShapeDtypeStruct((B_arr, N_pad), jnp.float32),
        grid=grid,
        in_specs=[
            pl.BlockSpec((BM, D), lambda i: (i, 0)),       # x tile per step
            pl.BlockSpec((D, N_pad), lambda i: (0, 0)),    # fused weight, resident
            pl.BlockSpec((1, N_pad), lambda i: (0, 0)),    # fused bias, resident
        ],
        out_specs=pl.BlockSpec((BM, N_pad), lambda i: (i, 0)),
        compiler_params=pltpu.CompilerParams(
            dimension_semantics=("parallel",),             # megacore split on v7x
            vmem_limit_bytes=vmem_limit),
    )(x_in, fused_w, fused_b)

    out = out_full[:B]
    pi = out[:, :G]
    sigma = out[:, G:G + GO].reshape(-1, G, output_dim)
    mu = out[:, G + GO:G + 2 * GO].reshape(-1, G, output_dim)
    return pi, mu, sigma


def init_params(key, input_dim, output_dim, num_gaussians):
    """Deterministic init matching the PyTorch module's __init__ scheme.
    Weights are returned already transposed to (in, out)."""
    G = num_gaussians
    GO = num_gaussians * output_dim
    k_pi, k_sig, k_mu = jax.random.split(key, 3)

    # xavier_uniform_ for pi.weight: U(-a, a), a = sqrt(6/(fan_in+fan_out))
    a_pi = math.sqrt(6.0 / (input_dim + G))
    pi_w = jax.random.uniform(k_pi, (input_dim, G), jnp.float32, -a_pi, a_pi)
    pi_b = jnp.zeros((1, G), jnp.float32)

    # xavier_normal_ for sigma.weight / mu.weight: N(0, 2/(fan_in+fan_out))
    std = math.sqrt(2.0 / (input_dim + GO))
    sig_w = std * jax.random.normal(k_sig, (input_dim, GO), jnp.float32)
    sig_b = jnp.zeros((1, GO), jnp.float32)
    mu_w = std * jax.random.normal(k_mu, (input_dim, GO), jnp.float32)
    mu_b = jnp.zeros((1, GO), jnp.float32)

    return pi_w, pi_b, sig_w, sig_b, mu_w, mu_b


def _reference(x, params, G, O):
    """Pure-JAX reference (mirrors the PyTorch forward)."""
    pi_w, pi_b, sig_w, sig_b, mu_w, mu_b = params
    pi = jax.nn.softmax(x @ pi_w + pi_b, axis=-1)
    sigma = jnp.exp(x @ sig_w + sig_b).reshape(-1, G, O)
    mu = (x @ mu_w + mu_b).reshape(-1, G, O)
    return pi, mu, sigma


if __name__ == "__main__":
    key = jax.random.PRNGKey(0)
    k_x, k_p = jax.random.split(key)

    batch = 8
    input_dim = 32
    output_dim = 2
    num_gaussians = 2
    # NOTE: at such tiny batch the pallas_call is pure fixed overhead; the
    # tiling/fusion above only pays off at realistic batch sizes (hundreds+).

    x = jax.random.normal(k_x, (batch, input_dim), jnp.float32)
    params = init_params(k_p, input_dim, output_dim, num_gaussians)
    fused_w, fused_b = fuse_mdn_params(params)      # one-time fusion, not per call

    pi, mu, sigma = mixture_density_mlp(
        x, fused_w, fused_b, num_gaussians, output_dim)
    jax.block_until_ready((pi, mu, sigma))

    assert pi.shape == (batch, num_gaussians)
    assert mu.shape == (batch, num_gaussians, output_dim)
    assert sigma.shape == (batch, num_gaussians, output_dim)
    assert bool(jnp.all(jnp.isfinite(pi))) and bool(jnp.all(jnp.isfinite(mu)))
    assert bool(jnp.all(sigma > 0.0))
    assert bool(jnp.allclose(jnp.sum(pi, axis=-1), 1.0, atol=1e-4))

    # Compare against the pure-JAX reference.
    pi_r, mu_r, sigma_r = _reference(x, params, num_gaussians, output_dim)
    assert bool(jnp.allclose(pi, pi_r, rtol=1e-3, atol=1e-5))
    assert bool(jnp.allclose(mu, mu_r, rtol=1e-3, atol=1e-4))
    assert bool(jnp.allclose(sigma, sigma_r, rtol=1e-3, atol=1e-4))

    # Also exercise a multi-tile / ragged-batch path (no full-array pad).
    big_B = 700
    xb = jax.random.normal(jax.random.PRNGKey(1), (big_B, input_dim), jnp.float32)
    pib, mub, sigb = mixture_density_mlp(
        xb, fused_w, fused_b, num_gaussians, output_dim)
    jax.block_until_ready((pib, mub, sigb))
    pib_r, mub_r, sigb_r = _reference(xb, params, num_gaussians, output_dim)
    assert bool(jnp.allclose(pib, pib_r, rtol=1e-3, atol=1e-5))
    assert bool(jnp.allclose(mub, mub_r, rtol=1e-3, atol=1e-4))
    assert bool(jnp.allclose(sigb, sigb_r, rtol=1e-3, atol=1e-4))

    print("KERNEL_OK")
</pallas_src>

<mosaic_0001>
module attributes {stable_mosaic.version = 11 : i64} {
  func.func @_mdn_fused_kernel(%arg0: i32, %arg1: memref<8x32xf32, #tpu.memory_space<vmem>>, %arg2: memref<32x128xf32, #tpu.memory_space<vmem>>, %arg3: memref<1x128xf32, #tpu.memory_space<vmem>>, %arg4: memref<8x128xf32, #tpu.memory_space<vmem>>) attributes {dimension_semantics = [#tpu.dimension_semantics<parallel>], iteration_bounds = array<i64: 1>, scalar_prefetch = 0 : i64, scratch_operands = 0 : i64, tpu.core_type = #tpu.core_type<tc>, window_params = [{transform_indices = @transform_0, window_bounds = array<i64: 8, 32>}, {pipeline_mode = #tpu.pipeline_mode<synchronous>, transform_indices = @transform_1, window_bounds = array<i64: 32, 128>}, {pipeline_mode = #tpu.pipeline_mode<synchronous>, transform_indices = @transform_2, window_bounds = array<i64: 1, 128>}, {transform_indices = @transform_3, window_bounds = array<i64: 8, 128>}]} {
    %c0 = arith.constant 0 : index
    %c0_0 = arith.constant 0 : index
    %0 = vector.load %arg1[%c0, %c0_0] : memref<8x32xf32, #tpu.memory_space<vmem>>, vector<8x32xf32>
    %c0_1 = arith.constant 0 : index
    %c0_2 = arith.constant 0 : index
    %1 = vector.load %arg2[%c0_1, %c0_2] : memref<32x128xf32, #tpu.memory_space<vmem>>, vector<32x128xf32>
    %cst = arith.constant dense<0.000000e+00> : vector<8x128xf32>
    %2 = tpu.matmul %0, %1, %cst {dimension_numbers = #tpu.dot_dimension_numbers<[1], [0], [0], [1], [0, 0, 1, 1], [], []>} : vector<8x32xf32>, vector<32x128xf32>, vector<8x128xf32> -> vector<8x128xf32>
    %c0_3 = arith.constant 0 : index
    %c0_4 = arith.constant 0 : index
    %3 = vector.load %arg3[%c0_3, %c0_4] : memref<1x128xf32, #tpu.memory_space<vmem>>, vector<1x128xf32>
    %4 = vector.broadcast %3 : vector<1x128xf32> to vector<8x128xf32>
    %5 = arith.addf %2, %4 : vector<8x128xf32>
    %6 = tpu.iota {dimensions = array<i32: 1>} : vector<1x128xi32>
    %c2_i32 = arith.constant 2 : i32
    %7 = vector.broadcast %c2_i32 : i32 to vector<1x128xi32>
    %8 = arith.cmpi slt, %6, %7 : vector<1x128xi32>
    %c2_i32_5 = arith.constant 2 : i32
    %9 = vector.broadcast %c2_i32_5 : i32 to vector<1x128xi32>
    %10 = arith.cmpi sge, %6, %9 : vector<1x128xi32>
    %c6_i32 = arith.constant 6 : i32
    %11 = vector.broadcast %c6_i32 : i32 to vector<1x128xi32>
    %12 = arith.cmpi slt, %6, %11 : vector<1x128xi32>
    %13 = arith.andi %10, %12 : vector<1x128xi1>
    %c6_i32_6 = arith.constant 6 : i32
    %14 = vector.broadcast %c6_i32_6 : i32 to vector<1x128xi32>
    %15 = arith.cmpi sge, %6, %14 : vector<1x128xi32>
    %c10_i32 = arith.constant 10 : i32
    %16 = vector.broadcast %c10_i32 : i32 to vector<1x128xi32>
    %17 = arith.cmpi slt, %6, %16 : vector<1x128xi32>
    %18 = arith.andi %15, %17 : vector<1x128xi1>
    %cst_7 = arith.constant 0xFF800000 : f32
    %19 = vector.shape_cast %8 : vector<1x128xi1> to vector<1x128xi1>
    %20 = vector.broadcast %19 : vector<1x128xi1> to vector<8x128xi1>
    %21 = vector.broadcast %cst_7 : f32 to vector<8x128xf32>
    %22 = arith.select %20, %5, %21 : vector<8x128xi1>, vector<8x128xf32>
    %cst_8 = arith.constant dense<0xFF800000> : vector<8xf32>
    %23 = vector.multi_reduction <maximumf>, %22, %cst_8 [1] : vector<8x128xf32> to vector<8xf32>
    %24 = vector.shape_cast %23 : vector<8xf32> to vector<8x1xf32>
    %cst_9 = arith.constant 0.000000e+00 : f32
    %25 = vector.shape_cast %8 : vector<1x128xi1> to vector<1x128xi1>
    %26 = vector.broadcast %25 : vector<1x128xi1> to vector<8x128xi1>
    %27 = vector.shape_cast %24 : vector<8x1xf32> to vector<8x1xf32>
    %28 = vector.broadcast %27 : vector<8x1xf32> to vector<8x128xf32>
    %29 = vector.broadcast %cst_9 : f32 to vector<8x128xf32>
    %30 = arith.select %26, %28, %29 : vector<8x128xi1>, vector<8x128xf32>
    %31 = arith.subf %5, %30 : vector<8x128xf32>
    %32 = math.exp %31 : vector<8x128xf32>
    %cst_10 = arith.constant 0.000000e+00 : f32
    %33 = vector.shape_cast %8 : vector<1x128xi1> to vector<1x128xi1>
    %34 = vector.broadcast %33 : vector<1x128xi1> to vector<8x128xi1>
    %35 = vector.broadcast %cst_10 : f32 to vector<8x128xf32>
    %36 = arith.select %34, %32, %35 : vector<8x128xi1>, vector<8x128xf32>
    %cst_11 = arith.constant dense<0.000000e+00> : vector<8xf32>
    %37 = vector.multi_reduction <add>, %36, %cst_11 [1] : vector<8x128xf32> to vector<8xf32>
    %38 = vector.shape_cast %37 : vector<8xf32> to vector<8x1xf32>
    %39 = tpu.reciprocal %38 : vector<8x1xf32> -> vector<8x1xf32>
    %40 = vector.broadcast %39 : vector<8x1xf32> to vector<8x128xf32>
    %41 = arith.mulf %32, %40 : vector<8x128xf32>
    %cst_12 = arith.constant 0.000000e+00 : f32
    %42 = vector.shape_cast %18 : vector<1x128xi1> to vector<1x128xi1>
    %43 = vector.broadcast %42 : vector<1x128xi1> to vector<8x128xi1>
    %44 = vector.broadcast %cst_12 : f32 to vector<8x128xf32>
    %45 = arith.select %43, %5, %44 : vector<8x128xi1>, vector<8x128xf32>
    %46 = vector.shape_cast %13 : vector<1x128xi1> to vector<1x128xi1>
    %47 = vector.broadcast %46 : vector<1x128xi1> to vector<8x128xi1>
    %48 = arith.select %47, %32, %45 : vector<8x128xi1>, vector<8x128xf32>
    %49 = vector.shape_cast %8 : vector<1x128xi1> to vector<1x128xi1>
    %50 = vector.broadcast %49 : vector<1x128xi1> to vector<8x128xi1>
    %51 = arith.select %50, %41, %48 : vector<8x128xi1>, vector<8x128xf32>
    %c0_13 = arith.constant 0 : index
    %c0_14 = arith.constant 0 : index
    %52 = vector.load %arg4[%c0_13, %c0_14] : memref<8x128xf32, #tpu.memory_space<vmem>>, vector<8x128xf32>
    tpu.vector_store %arg4[%c0_13, %c0_14], %51 {strides = array<i32>} : memref<8x128xf32, #tpu.memory_space<vmem>>, vector<8x128xf32>,
    return
  }
  func.func @transform_0(%arg0: i32) -> (i32, i32) {
    %c0_i32 = arith.constant 0 : i32
    %c0_i32_0 = arith.constant 0 : i32
    return %arg0, %c0_i32 : i32, i32
  }
  func.func @transform_1(%arg0: i32) -> (i32, i32) {
    %c0_i32 = arith.constant 0 : i32
    %c0_i32_0 = arith.constant 0 : i32
    %c0_i32_1 = arith.constant 0 : i32
    return %c0_i32, %c0_i32_0 : i32, i32
  }
  func.func @transform_2(%arg0: i32) -> (i32, i32) {
    %c0_i32 = arith.constant 0 : i32
    %c0_i32_0 = arith.constant 0 : i32
    %c0_i32_1 = arith.constant 0 : i32
    return %c0_i32, %c0_i32_0 : i32, i32
  }
  func.func @transform_3(%arg0: i32) -> (i32, i32) {
    %c0_i32 = arith.constant 0 : i32
    %c0_i32_0 = arith.constant 0 : i32
    return %arg0, %c0_i32 : i32, i32
  }
}

</mosaic_0001>

<llo_original>
// kernel: tpu_custom_call.1
$region0: #{tpu_custom_call.1}
  #allocation0 [shape = 'u32[]', space=smem, size = 0x4, offset = 0x4, fixed_abs, tag = 'smem constant byte address 0x4 - core index']
  #allocation1 [shape = 'u32[144,128]{1,0:T(1,128)}', space=vmem, size = 0x12000, scoped, tag = 'internal scratch']
  %s0 = inlined_call_operand.hbm [shape: f32[8,32], index: 0, kind: input, shape index: {}]
  %s1 = inlined_call_operand.hbm [shape: f32[32,128], index: 1, kind: input, shape index: {}]
  %s2 = inlined_call_operand.vmem [shape: f32[1,128], index: 2, kind: input, shape index: {}]
  %s3 = inlined_call_operand.hbm [shape: f32[8,128], index: 3, kind: output, shape index: {}]
  %s4 = sld [smem:[#allocation0]]
  $region30: #{tpu_custom_call.1} parent=0
    _
  %s6 = ssub.s32 1, %s4
  %s7 = scalar_select 0, %s6, %s4
  $region1: #{tpu_custom_call.1} parent=0
    #allocation2 [shape = 'u8[4096]{0}', space=vmem, size = 0x1000, scoped, tag = 'input window, operand 0, single buffered']
    #allocation3 [shape = 's32[1]{0}', space=sflag, size = 0x4, scoped, tag = 'scoped memory for tpu_custom_call.1']
    #allocation4 [shape = 's32[1]{0}', space=sflag, size = 0x4, scoped, tag = 'scoped memory for tpu_custom_call.1']
    #allocation5 [shape = 'u8[16384]{0}', space=vmem, size = 0x4000, scoped, tag = 'input window, operand 1, single buffered']
    #allocation6 [shape = 's32[1]{0}', space=sflag, size = 0x4, scoped, tag = 'scoped memory for tpu_custom_call.1']
    #allocation7 [shape = 'u8[4096]{0}', space=vmem, size = 0x1000, scoped, tag = 'output window, operand 0, single buffered']
    %8 = vsyncpa [#allocation3], 0
    %9 = vsyncpa [#allocation6], 0
    %10 = vsyncpa [#allocation4], 0
    // Predicated region
    $region2: #{tpu_custom_call.1} parent=1 // pred_check
      _
    $region3: #{tpu_custom_call.1} parent=1 // pred_check_branch
      %12 = sbr.rel (0) target = $region5
    $region4: #{tpu_custom_call.1} parent=1 // pred_region
      %s14 = ssub.s32 128, 128
      %15 = vsyncadd [#allocation3], %s14
      %s17 = sshll.u32 [#allocation2], 4
      %s18 = int_to_ptr.vmem [resolvable:$true] %s17
      %20 = dma.hbm_to_vmem [thread:$0]  %s0, 128, %s18, [#allocation3]
    $region5: #{tpu_custom_call.1} parent=1 // pred_fallthru
      _
    // Predicated region
    $region6: #{tpu_custom_call.1} parent=1 // pred_check
      _
    $region7: #{tpu_custom_call.1} parent=1 // pred_check_branch
      %22 = sbr.rel (0) target = $region9
    $region8: #{tpu_custom_call.1} parent=1 // pred_region
      %s24 = ssub.s32 512, 512
      %25 = vsyncadd [#allocation6], %s24
      %s26 = sshll.u32 [#allocation5], 4
      %s27 = int_to_ptr.vmem [resolvable:$true] %s26
      %32 = dma.hbm_to_vmem [thread:$0]  %s1, 512, %s27, [#allocation6], 128, 128, 8
    $region9: #{tpu_custom_call.1} parent=1 // pred_fallthru
      _
    // Predicated region
    $region10: #{tpu_custom_call.1} parent=1 // pred_check
      _
    $region11: #{tpu_custom_call.1} parent=1 // pred_check_branch
      %34 = sbr.rel (0) target = $region13
    $region12: #{tpu_custom_call.1} parent=1 // pred_region
      _
    $region13: #{tpu_custom_call.1} parent=1 // pred_fallthru
      _
    // Predicated region
    $region14: #{tpu_custom_call.1} parent=1 // pred_check
      _
    $region15: #{tpu_custom_call.1} parent=1 // pred_check_branch
      %36 = sbr.rel (0) target = $region17
    $region16: #{tpu_custom_call.1} parent=1 // pred_region
      %37 = dma.done [#allocation3], 128
    $region17: #{tpu_custom_call.1} parent=1 // pred_fallthru
      _
    // Predicated region
    $region18: #{tpu_custom_call.1} parent=1 // pred_check
      _
    $region19: #{tpu_custom_call.1} parent=1 // pred_check_branch
      %39 = sbr.rel (0) target = $region21
    $region20: #{tpu_custom_call.1} parent=1 // pred_region
      %40 = dma.done [#allocation6], 512
    $region21: #{tpu_custom_call.1} parent=1 // pred_fallthru
      _
    %v41 = vld [vmem:[#allocation2] sm:$0xff]
    %v42 = vld [vmem:[#allocation5] sm:$0xff]
    %v43 = vld [vmem:[#allocation5 + $0x8] sm:$0xff]
    %v44 = vld [vmem:[#allocation5 + $0x10] sm:$0xff]
    %v45 = vld [vmem:[#allocation5 + $0x18] sm:$0xff]
    %v46 = vld [vmem:[%s2] sm:$0x1]
    %v48 = vlaneseq
    %v49 = vshrl.u32 %v48, 7
    %v50 = vsub.s32 0, %v49
    %v51 = vrot.slane %v46, %v50
    %vm53 = vcmask 261120
    %v55 = vsel %vm53, %v41, 0
    %57 = vmatprep.subr.mxu0 0.0
    %58 = vmatpush1.msra.mxu0 0.0
    %59 = vmatprep.subr.mxu0 0.0
    %60 = vmatpush1.msra.mxu0 0.0
    %61 = vmatprep.subr.mxu0 0.0
    %62 = vmatpush1.msra.mxu0 0.0
    %63 = vmatprep.subr.mxu0 0.0
    %64 = vmatpush1.msra.mxu0 0.0
    %65 = vmatprep.subr.mxu0 0.0
    %66 = vmatpush1.msra.mxu0 0.0
    %67 = vmatprep.subr.mxu0 0.0
    %68 = vmatpush1.msra.mxu0 0.0
    %69 = vmatprep.subr.mxu0 0.0
    %70 = vmatpush1.msra.mxu0 0.0
    %71 = vmatprep.subr.mxu0 0.0
    %72 = vmatpush1.msra.mxu0 0.0
    %73 = vmatprep.subr.mxu0 0.0
    %74 = vmatpush1.msra.mxu0 0.0
    %75 = vmatprep.subr.mxu0 0.0
    %76 = vmatpush1.msra.mxu0 0.0
    %77 = vmatprep.subr.mxu0 0.0
    %78 = vmatpush1.msra.mxu0 0.0
    %79 = vmatprep.subr.mxu0 0.0
    %80 = vmatpush1.msra.mxu0 0.0
    %81 = vmatprep.subr.mxu0 0.0
    %82 = vmatpush1.msra.mxu0 %v45
    %83 = vmatprep.subr.mxu0 0.0
    %84 = vmatpush1.msra.mxu0 %v44
    %85 = vmatprep.subr.mxu0 0.0
    %86 = vmatpush1.msra.mxu0 %v43
    %87 = vmatprep.subr.mxu0 0.0
    %88 = vmatpush1.msra.mxu0 %v42
    %89 = vmatprep.subr.mxu0 0.0
    %90 = vmatpush2.msra.mxu0 0.0
    %91 = vmatprep.subr.mxu0 0.0
    %92 = vmatpush2.msra.mxu0 0.0
    %93 = vmatprep.subr.mxu0 0.0
    %94 = vmatpush2.msra.mxu0 0.0
    %95 = vmatprep.subr.mxu0 0.0
    %96 = vmatpush2.msra.mxu0 0.0
    %97 = vmatprep.subr.mxu0 0.0
    %98 = vmatpush2.msra.mxu0 0.0
    %99 = vmatprep.subr.mxu0 0.0
    %100 = vmatpush2.msra.mxu0 0.0
    %101 = vmatprep.subr.mxu0 0.0
    %102 = vmatpush2.msra.mxu0 0.0
    %103 = vmatprep.subr.mxu0 0.0
    %104 = vmatpush2.msra.mxu0 0.0
    %105 = vmatprep.subr.mxu0 0.0
    %106 = vmatpush2.msra.mxu0 0.0
    %107 = vmatprep.subr.mxu0 0.0
    %108 = vmatpush2.msra.mxu0 0.0
    %109 = vmatprep.subr.mxu0 0.0
    %110 = vmatpush2.msra.mxu0 0.0
    %111 = vmatprep.subr.mxu0 0.0
    %112 = vmatpush2.msra.mxu0 0.0
    %113 = vmatprep.subr.mxu0 0.0
    %114 = vmatpush2.msra.mxu0 0.0
    %115 = vmatprep.subr.mxu0 0.0
    %116 = vmatpush2.msra.mxu0 0.0
    %117 = vmatprep.subr.mxu0 0.0
    %118 = vmatpush2.msra.mxu0 0.0
    %119 = vmatprep.subr.mxu0 0.0
    %120 = vmatpush2.msra.mxu0 0.0
    %121 = vmatprep.mubr.f32.mxu0 0.0
    %122 = vmatmul.mubr.f32.gmra.mxu0 %v55
    %v123 = vpop.f32.mrf.mxu0
    %v124 = vadd.f32 %v51, %v123
    %v125 = vpop.f32.mrf.mxu0
    %126 = vdwg.mxu0
    %v127 = vlaneseq
    %v128 = vand.u32 %v127, 127
    %vm129 = vcmp.lt.s32.totalorder %v128, 2
    %vm130 = vcmp.ge.s32.totalorder %v128, 2
    %vm131 = vcmp.lt.s32.totalorder %v128, 6
    %vm132 = vmand %vm130, %vm131
    %vm133 = vcmp.ge.s32.totalorder %v128, 6
    %vm134 = vcmp.lt.s32.totalorder %v128, 10
    %vm135 = vmand %vm133, %vm134
    %v136 = vsel %vm129, 1, 0
    %vm137 = vcmp.eq.s32.totalorder %v136, 1
    %v138 = vsel %vm137, %v124, -inf
    %139 = vmax.xlane.f32.xlu0 %v138
    %v140 = vpop.xlane.xlu0 %139
    %v141 = vsel %vm137, %v140, 0.0
    %v142 = vsub.f32 %v124, %v141
    %v143 = vmul.f32 %v142, 1.442695
    %v144 = vpow.pop %v143
    %v145 = vsel %vm137, %v144, 0.0
    %146 = vadd.xlane.f32.xlu0 %v145
    %v147 = vpop.xlane.xlu0 %146
    %v148 = vrcp.pop %v147
    %v149 = vmul.f32 %v144, %v148
    %v150 = vsel %vm135, 1, 0
    %vm151 = vcmp.eq.s32.totalorder %v150, 1
    %v152 = vsel %vm151, %v124, 0.0
    %v153 = vsel %vm132, 1, 0
    %vm154 = vcmp.eq.s32.totalorder %v153, 1
    %v155 = vsel %vm154, %v144, %v152
    %v156 = vsel %vm137, %v149, %v155
    %157 = vst [vmem:[#allocation7] sm:$0xff] %v156
    // Predicated region
    $region22: #{tpu_custom_call.1} parent=1 // pred_check
      _
    $region23: #{tpu_custom_call.1} parent=1 // pred_check_branch
      %159 = sbr.rel (0) target = $region25
    $region24: #{tpu_custom_call.1} parent=1 // pred_region
      %s161 = ssub.s32 128, 128
      %162 = vsyncadd [#allocation4], %s161
      %s164 = sshll.u32 [#allocation7], 4
      %s165 = int_to_ptr.vmem [resolvable:$true] %s164
      %167 = dma.vmem_to_hbm [thread:$0]  %s165, 128, %s3, [#allocation4]
    $region25: #{tpu_custom_call.1} parent=1 // pred_fallthru
      _
    // Predicated region
    $region26: #{tpu_custom_call.1} parent=1 // pred_check
      _
    $region27: #{tpu_custom_call.1} parent=1 // pred_check_branch
      %169 = sbr.rel (0) target = $region29
    $region28: #{tpu_custom_call.1} parent=1 // pred_region
      %170 = dma.done [#allocation4], 128
    $region29: #{tpu_custom_call.1} parent=1 // pred_fallthru
      _
    %171 = vsyncpa [#allocation3], 1
    %172 = vsyncpa [#allocation6], 1
    %173 = vsyncpa [#allocation4], 1

</llo_original>
